<compile_context>
chip_gen: v7x
topology: tpu7x:2x2x1
jax: 0.10.0
libtpu: 0.0.40
codegen_flags: <defaults>
</compile_context>

<pallas_src>
import functools

import jax
import jax.numpy as jnp
from jax import lax
from jax.experimental import pallas as pl
from jax.experimental.pallas import tpu as pltpu

LANES = 128
TARGET_ROW_TILE = 8192   # 8192 x 128 f32 = 4 MiB per input tile per pipeline buffer
CHUNK_ROWS = 1024        # in-kernel reduction chunk (bounds live f32 intermediates)


def _round_up(x: int, m: int) -> int:
    return ((x + m - 1) // m) * m


def _cdiv(a: int, b: int) -> int:
    return -(-a // b)


def _sublane_multiple(dtype) -> int:
    """Minimum sublane tile granularity for a dtype (f32->8, bf16->16, int8->32)."""
    itemsize = jnp.dtype(dtype).itemsize
    if itemsize >= 4:
        return 8
    return 8 * (4 // itemsize)


def _neg_sentinel(dtype):
    """Most-negative finite value of dtype; sigmoid(sentinel) == 0.0 exactly in f32."""
    dt = jnp.dtype(dtype)
    if jnp.issubdtype(dt, jnp.floating):
        return float(-jnp.finfo(dt).max)
    if jnp.issubdtype(dt, jnp.integer):
        return int(jnp.iinfo(dt).min)
    return 0


def _dice_partial_kernel(x_ref, t_ref, o_ref, *, n_chunks, chunk, row_tile,
                         total_rows, masked):
    """Per-block, lane-dense partial sums (reduced over the sublane/row axis only).

    o_ref[0, k, :] = sum over this block's valid rows of:
      k=0: p*t   k=1: p   k=2: t   k=3: (1-p)*(1-t)   k=4: (1-p)   k=5: (1-t)
    """
    if masked:
        # Row-level validity (only the last block can be partial).  Row-index
        # compare (never a flat element index) -> no int32 overflow for huge inputs.
        limit = total_rows - pl.program_id(0) * row_tile          # scalar int32
        row_ids = lax.broadcasted_iota(jnp.int32, (chunk, LANES), 0)  # loop-invariant

    def slab_sums(x_slab, t_slab, base_row):
        p = jax.nn.sigmoid(x_slab.astype(jnp.float32))
        t = t_slab.astype(jnp.float32)
        if masked:
            valid = (row_ids + base_row) < limit
            p = jnp.where(valid, p, 0.0)     # where (not mul): NaN-safe vs stale VMEM
            t = jnp.where(valid, t, 0.0)
            m = valid.astype(jnp.float32)
            ip = m - p                       # 0 on invalid rows, 1-p on valid rows
            it = m - t
        else:
            ip = 1.0 - p
            it = 1.0 - t
        return (
            jnp.sum(p * t, axis=0, keepdims=True),
            jnp.sum(p, axis=0, keepdims=True),
            jnp.sum(t, axis=0, keepdims=True),
            jnp.sum(ip * it, axis=0, keepdims=True),
            jnp.sum(ip, axis=0, keepdims=True),
            jnp.sum(it, axis=0, keepdims=True),
        )

    if n_chunks == 1:
        sums = slab_sums(x_ref[...], t_ref[...], 0)
    else:
        def body(c, carry):
            r0 = pl.multiple_of(c * chunk, chunk)
            s = slab_sums(x_ref[pl.ds(r0, chunk), :],
                          t_ref[pl.ds(r0, chunk), :],
                          c * chunk)
            return tuple(a + b for a, b in zip(carry, s))

        zero = jnp.zeros((1, LANES), jnp.float32)
        sums = lax.fori_loop(0, n_chunks, body, (zero,) * 6)

    for k in range(6):
        o_ref[0, k:k + 1, :] = sums[k]


def complete_dice_loss(logits, targets):
    """Pallas implementation of CompleteDiceLoss.forward (returns scalar f32)."""
    n_elems = logits.size
    assert targets.size == n_elems

    flat_x = logits.reshape(-1)   # keep native dtype; cast to f32 inside the kernel
    flat_t = targets.reshape(-1)

    sub = max(_sublane_multiple(flat_x.dtype), _sublane_multiple(flat_t.dtype))

    rows = _cdiv(n_elems, LANES)
    # Host pad ONLY when unavoidable (ragged lane tail or tiny input).  Padded
    # logits get a sentinel (sigmoid -> exactly 0) and padded targets get 0, so
    # the kernel needs no per-element mask; the wrapper subtracts the exact pad
    # count from the three inverse sums.
    if rows * LANES != n_elems or rows < sub:
        rows = max(_round_up(rows, sub), sub)
        pad_n = rows * LANES - n_elems
        flat_x = jnp.pad(flat_x, (0, pad_n), constant_values=_neg_sentinel(flat_x.dtype))
        flat_t = jnp.pad(flat_t, (0, pad_n), constant_values=0)
    else:
        pad_n = 0

    x2d = flat_x.reshape(rows, LANES)
    t2d = flat_t.reshape(rows, LANES)

    # Tile selection: tiles up to 8192 rows (4 MiB f32 per input per step) to
    # amortize per-step overhead, but at least 2 grid steps when the input allows
    # it so both v7x TensorCores get work ("parallel" is a no-op on v5e/v6e).
    if rows < 2 * sub:
        row_tile = rows                      # single full-extent block
        chunk = rows
    elif rows <= CHUNK_ROWS:
        row_tile = _round_up(_cdiv(rows, 2), sub)
        chunk = row_tile
    else:
        row_tile = min(TARGET_ROW_TILE, _round_up(_cdiv(rows, 2), CHUNK_ROWS))
        chunk = CHUNK_ROWS
    steps = _cdiv(rows, row_tile)
    n_chunks = row_tile // chunk
    masked = (rows % row_tile) != 0          # static: mask-free kernel in the common case

    kernel = functools.partial(
        _dice_partial_kernel,
        n_chunks=n_chunks, chunk=chunk, row_tile=row_tile,
        total_rows=rows, masked=masked)

    partials = pl.pallas_call(
        kernel,
        out_shape=jax.ShapeDtypeStruct((steps, 6, LANES), jnp.float32),
        grid_spec=pltpu.PrefetchScalarGridSpec(
            num_scalar_prefetch=0,
            grid=(steps,),
            in_specs=[
                pl.BlockSpec((row_tile, LANES), lambda i: (i, 0)),
                pl.BlockSpec((row_tile, LANES), lambda i: (i, 0)),
            ],
            out_specs=pl.BlockSpec((1, 6, LANES), lambda i: (i, 0, 0)),
        ),
        compiler_params=pltpu.CompilerParams(
            dimension_semantics=("parallel",),
            vmem_limit_bytes=40 * 1024 * 1024,   # <= ~48 MiB keeps v7x (64 MiB VMEM) safe
        ),
    )(x2d, t2d)

    # Tiny final reduction + scalar dice formula in plain JAX.
    sums = jnp.sum(partials, axis=(0, 2), dtype=jnp.float32)
    s_pt, s_p, s_t = sums[0], sums[1], sums[2]
    s_ipt, s_ip, s_it = sums[3], sums[4], sums[5]
    if pad_n:
        # Each padded element contributed exactly 1.0 to every inverse sum.
        padf = jnp.float32(pad_n)
        s_ipt = s_ipt - padf
        s_ip = s_ip - padf
        s_it = s_it - padf

    smooth = jnp.float32(1e-10)
    loss = (
        jnp.float32(2.0)
        - (2.0 * s_pt + smooth) / (s_p + s_t + smooth)
        - (2.0 * s_ipt + smooth) / (s_ip + s_it + smooth)
    )
    return loss


def _reference(logits, targets):
    smooth = 1e-10
    p = jax.nn.sigmoid(logits.astype(jnp.float32)).reshape(-1)
    t = targets.astype(jnp.float32).reshape(-1)
    inter = jnp.sum(p * t)
    inv_inter = jnp.sum((1.0 - p) * (1.0 - t))
    return (
        2.0
        - (2.0 * inter + smooth) / (jnp.sum(p) + jnp.sum(t) + smooth)
        - (2.0 * inv_inter + smooth)
        / (jnp.sum(1.0 - p) + jnp.sum(1.0 - t) + smooth)
    )


if __name__ == "__main__":
    key = jax.random.PRNGKey(0)

    # Primary shape: NCHW as in the PyTorch module.
    B, C, H, W = 2, 4, 16, 16
    k1, k2 = jax.random.split(key)
    logits = jax.random.normal(k1, (B, C, H, W), dtype=jnp.float32)
    targets = (jax.random.uniform(k2, (B, C, H, W)) > 0.5).astype(jnp.float32)

    loss = jax.block_until_ready(complete_dice_loss(logits, targets))
    ref = jax.block_until_ready(_reference(logits, targets))
    assert jnp.allclose(loss, ref, atol=1e-5, rtol=1e-5), (loss, ref)

    # Extra small-shape checks: ragged (sentinel-pad path), partial last block
    # (row-mask path) and multi-chunk in-kernel reduction path.
    for shape in [(3, 5, 7), (4, 640), (1, 4096 * 128)]:
        key, ka, kb = jax.random.split(key, 3)
        xs = jax.random.normal(ka, shape, dtype=jnp.float32)
        ts = (jax.random.uniform(kb, shape) > 0.5).astype(jnp.float32)
        got = jax.block_until_ready(complete_dice_loss(xs, ts))
        want = jax.block_until_ready(_reference(xs, ts))
        assert jnp.allclose(got, want, atol=1e-5, rtol=1e-5), (shape, got, want)

    print("KERNEL_OK")
</pallas_src>

<mosaic_0001>
module attributes {stable_mosaic.version = 11 : i64} {
  func.func @_dice_partial_kernel(%arg0: i32, %arg1: memref<8x128xf32, #tpu.memory_space<vmem>>, %arg2: memref<8x128xf32, #tpu.memory_space<vmem>>, %arg3: memref<1x6x128xf32, #tpu.memory_space<vmem>>) attributes {dimension_semantics = [#tpu.dimension_semantics<parallel>], iteration_bounds = array<i64: 2>, scalar_prefetch = 0 : i64, scratch_operands = 0 : i64, tpu.core_type = #tpu.core_type<tc>, window_params = [{transform_indices = @transform_0, window_bounds = array<i64: 8, 128>}, {transform_indices = @transform_1, window_bounds = array<i64: 8, 128>}, {transform_indices = @transform_2, window_bounds = array<i64: 1, 6, 128>}]} {
    %c0 = arith.constant 0 : index
    %c0_0 = arith.constant 0 : index
    %0 = vector.load %arg1[%c0, %c0_0] : memref<8x128xf32, #tpu.memory_space<vmem>>, vector<8x128xf32>
    %c0_1 = arith.constant 0 : index
    %c0_2 = arith.constant 0 : index
    %1 = vector.load %arg2[%c0_1, %c0_2] : memref<8x128xf32, #tpu.memory_space<vmem>>, vector<8x128xf32>
    %2 = arith.negf %0 : vector<8x128xf32>
    %3 = math.exp %2 : vector<8x128xf32>
    %cst = arith.constant 1.000000e+00 : f32
    %4 = vector.broadcast %cst : f32 to vector<8x128xf32>
    %5 = arith.addf %4, %3 : vector<8x128xf32>
    %6 = arith.divf %4, %5 : vector<8x128xf32>
    %cst_3 = arith.constant 1.000000e+00 : f32
    %7 = vector.broadcast %cst_3 : f32 to vector<8x128xf32>
    %8 = arith.subf %7, %6 : vector<8x128xf32>
    %cst_4 = arith.constant 1.000000e+00 : f32
    %9 = vector.broadcast %cst_4 : f32 to vector<8x128xf32>
    %10 = arith.subf %9, %1 : vector<8x128xf32>
    %11 = arith.mulf %6, %1 : vector<8x128xf32>
    %cst_5 = arith.constant dense<0.000000e+00> : vector<128xf32>
    %12 = vector.multi_reduction <add>, %11, %cst_5 [0] : vector<8x128xf32> to vector<128xf32>
    %13 = vector.shape_cast %12 : vector<128xf32> to vector<1x128xf32>
    %cst_6 = arith.constant dense<0.000000e+00> : vector<128xf32>
    %14 = vector.multi_reduction <add>, %6, %cst_6 [0] : vector<8x128xf32> to vector<128xf32>
    %15 = vector.shape_cast %14 : vector<128xf32> to vector<1x128xf32>
    %cst_7 = arith.constant dense<0.000000e+00> : vector<128xf32>
    %16 = vector.multi_reduction <add>, %1, %cst_7 [0] : vector<8x128xf32> to vector<128xf32>
    %17 = vector.shape_cast %16 : vector<128xf32> to vector<1x128xf32>
    %18 = arith.mulf %8, %10 : vector<8x128xf32>
    %cst_8 = arith.constant dense<0.000000e+00> : vector<128xf32>
    %19 = vector.multi_reduction <add>, %18, %cst_8 [0] : vector<8x128xf32> to vector<128xf32>
    %20 = vector.shape_cast %19 : vector<128xf32> to vector<1x128xf32>
    %cst_9 = arith.constant dense<0.000000e+00> : vector<128xf32>
    %21 = vector.multi_reduction <add>, %8, %cst_9 [0] : vector<8x128xf32> to vector<128xf32>
    %22 = vector.shape_cast %21 : vector<128xf32> to vector<1x128xf32>
    %cst_10 = arith.constant dense<0.000000e+00> : vector<128xf32>
    %23 = vector.multi_reduction <add>, %10, %cst_10 [0] : vector<8x128xf32> to vector<128xf32>
    %24 = vector.shape_cast %23 : vector<128xf32> to vector<1x128xf32>
    %c0_11 = arith.constant 0 : index
    %c0_12 = arith.constant 0 : index
    %c0_13 = arith.constant 0 : index
    %25 = vector.load %arg3[%c0_11, %c0_12, %c0_13] : memref<1x6x128xf32, #tpu.memory_space<vmem>>, vector<1x1x128xf32>
    %26 = vector.shape_cast %25 : vector<1x1x128xf32> to vector<1x128xf32>
    %27 = vector.shape_cast %13 : vector<1x128xf32> to vector<1x1x128xf32>
    tpu.vector_store %arg3[%c0_11, %c0_12, %c0_13], %27 {strides = array<i32>} : memref<1x6x128xf32, #tpu.memory_space<vmem>>, vector<1x1x128xf32>,
    %c0_14 = arith.constant 0 : index
    %c1 = arith.constant 1 : index
    %c0_15 = arith.constant 0 : index
    %28 = vector.load %arg3[%c0_14, %c1, %c0_15] : memref<1x6x128xf32, #tpu.memory_space<vmem>>, vector<1x1x128xf32>
    %29 = vector.shape_cast %28 : vector<1x1x128xf32> to vector<1x128xf32>
    %30 = vector.shape_cast %15 : vector<1x128xf32> to vector<1x1x128xf32>
    tpu.vector_store %arg3[%c0_14, %c1, %c0_15], %30 {strides = array<i32>} : memref<1x6x128xf32, #tpu.memory_space<vmem>>, vector<1x1x128xf32>,
    %c0_16 = arith.constant 0 : index
    %c2 = arith.constant 2 : index
    %c0_17 = arith.constant 0 : index
    %31 = vector.load %arg3[%c0_16, %c2, %c0_17] : memref<1x6x128xf32, #tpu.memory_space<vmem>>, vector<1x1x128xf32>
    %32 = vector.shape_cast %31 : vector<1x1x128xf32> to vector<1x128xf32>
    %33 = vector.shape_cast %17 : vector<1x128xf32> to vector<1x1x128xf32>
    tpu.vector_store %arg3[%c0_16, %c2, %c0_17], %33 {strides = array<i32>} : memref<1x6x128xf32, #tpu.memory_space<vmem>>, vector<1x1x128xf32>,
    %c0_18 = arith.constant 0 : index
    %c3 = arith.constant 3 : index
    %c0_19 = arith.constant 0 : index
    %34 = vector.load %arg3[%c0_18, %c3, %c0_19] : memref<1x6x128xf32, #tpu.memory_space<vmem>>, vector<1x1x128xf32>
    %35 = vector.shape_cast %34 : vector<1x1x128xf32> to vector<1x128xf32>
    %36 = vector.shape_cast %20 : vector<1x128xf32> to vector<1x1x128xf32>
    tpu.vector_store %arg3[%c0_18, %c3, %c0_19], %36 {strides = array<i32>} : memref<1x6x128xf32, #tpu.memory_space<vmem>>, vector<1x1x128xf32>,
    %c0_20 = arith.constant 0 : index
    %c4 = arith.constant 4 : index
    %c0_21 = arith.constant 0 : index
    %37 = vector.load %arg3[%c0_20, %c4, %c0_21] : memref<1x6x128xf32, #tpu.memory_space<vmem>>, vector<1x1x128xf32>
    %38 = vector.shape_cast %37 : vector<1x1x128xf32> to vector<1x128xf32>
    %39 = vector.shape_cast %22 : vector<1x128xf32> to vector<1x1x128xf32>
    tpu.vector_store %arg3[%c0_20, %c4, %c0_21], %39 {strides = array<i32>} : memref<1x6x128xf32, #tpu.memory_space<vmem>>, vector<1x1x128xf32>,
    %c0_22 = arith.constant 0 : index
    %c5 = arith.constant 5 : index
    %c0_23 = arith.constant 0 : index
    %40 = vector.load %arg3[%c0_22, %c5, %c0_23] : memref<1x6x128xf32, #tpu.memory_space<vmem>>, vector<1x1x128xf32>
    %41 = vector.shape_cast %40 : vector<1x1x128xf32> to vector<1x128xf32>
    %42 = vector.shape_cast %24 : vector<1x128xf32> to vector<1x1x128xf32>
    tpu.vector_store %arg3[%c0_22, %c5, %c0_23], %42 {strides = array<i32>} : memref<1x6x128xf32, #tpu.memory_space<vmem>>, vector<1x1x128xf32>,
    return
  }
  func.func @transform_0(%arg0: i32) -> (i32, i32) {
    %c0_i32 = arith.constant 0 : i32
    %c0_i32_0 = arith.constant 0 : i32
    return %arg0, %c0_i32 : i32, i32
  }
  func.func @transform_1(%arg0: i32) -> (i32, i32) {
    %c0_i32 = arith.constant 0 : i32
    %c0_i32_0 = arith.constant 0 : i32
    return %arg0, %c0_i32 : i32, i32
  }
  func.func @transform_2(%arg0: i32) -> (i32, i32, i32) {
    %c0_i32 = arith.constant 0 : i32
    %c0_i32_0 = arith.constant 0 : i32
    %c0_i32_1 = arith.constant 0 : i32
    return %arg0, %c0_i32, %c0_i32_0 : i32, i32, i32
  }
}

</mosaic_0001>

<llo_original>
// kernel: tpu_custom_call.1
$region0: #{tpu_custom_call.1}
  #allocation0 [shape = 'u32[]', space=smem, size = 0x4, offset = 0x4, fixed_abs, tag = 'smem constant byte address 0x4 - core index']
  #allocation1 [shape = 'u32[144,128]{1,0:T(1,128)}', space=vmem, size = 0x12000, scoped, tag = 'internal scratch']
  %s0 = inlined_call_operand.hbm [shape: f32[16,128], index: 0, kind: input, shape index: {}]
  %s1 = inlined_call_operand.hbm [shape: f32[16,128], index: 1, kind: input, shape index: {}]
  %s2 = inlined_call_operand.vmem [shape: f32[2,6,128], index: 2, kind: output, shape index: {}]
  %s3 = sld [smem:[#allocation0]]
  $region49: #{tpu_custom_call.1} parent=0
    _
  %s5 = ssub.s32 1, %s3
  %s6 = scalar_select 0, %s5, %s3
  $region1: #{tpu_custom_call.1} parent=0
    #allocation2 [shape = 'u8[8192]{0}', space=vmem, size = 0x2000, scoped, tag = 'input window, operand 0']
    #allocation3 [shape = 's32[2]{0}', space=sflag, size = 0x8, scoped, tag = 'scoped memory for tpu_custom_call.1']
    #allocation4 [shape = 'u8[8192]{0}', space=vmem, size = 0x2000, scoped, tag = 'input window, operand 1']
    #allocation5 [shape = 's32[2]{0}', space=sflag, size = 0x8, scoped, tag = 'scoped memory for tpu_custom_call.1']
    %7 = vsyncpa [#allocation3], 0
    %s8 = scalar_lea.sflag [#allocation3], 1
    %9 = vsyncpa %s8, 0
    %10 = vsyncpa [#allocation5], 0
    %s11 = scalar_lea.sflag [#allocation5], 1
    %12 = vsyncpa %s11, 0
    loop: start=0, step=1, limit=4
    $region2: #{tpu_custom_call.1} parent=1 // loop_pre_header
      _
    $region3: #{tpu_custom_call.1} parent=1 // loop_header
      %s14 = sphi 0, %s18
      %p15 = scmp.ge.s32.totalorder %s14, 4
      %s24 = sphi 0, %s26
      %s27 = sphi 0, %s24
      %s28 = sphi 0, %s27
      %s44 = sphi 0, %s28
      %s50 = sphi 0, %s52
      %s53 = sphi 0, %s50
      %s54 = sphi 0, %s53
      %s70 = sphi 0, %s54
      %s76 = sphi 0, %s78
      %s79 = sphi 0, %s76
      %s80 = sphi 0, %s79
      %s96 = sphi 0, %s80
    $region4: #{tpu_custom_call.1} parent=1 // loop_header_branch
      %17 = sbr.rel (%p15) target = $region8
    $region5: #{tpu_custom_call.1} parent=1 // loop_body
      %s19 = ssub.s32 %s14, 1
      %s20 = ssub.s32 %s14, 2
      %s21 = sadd.s32 %s14, 1
      %s22 = ssub.s32 %s14, %s21
      %p23 = scmp.eq.s32.totalorder %s22, 0
      %s25 = sadd.s32 %s24, 1
      %s26 = scalar_select %p23, %s24, %s25
      %p29 = pneg %p23
      %p30 = scmp.eq.s32.totalorder %s14, 1
      %p31 = por %p29, %p30
      %p32 = scmp.ne.s32.totalorder %s24, %s27
      %p33 = scmp.eq.s32.totalorder %s14, 0
      %p34 = por %p32, %p33
      %p35 = scmp.ne.s32.totalorder %s24, %s27
      %p36 = scmp.eq.s32.totalorder %s19, 1
      %p37 = por %p35, %p36
      %p38 = scmp.ne.s32.totalorder %s27, %s28
      %p39 = scmp.eq.s32.totalorder %s19, 0
      %p40 = por %p38, %p39
      %p41 = scmp.ne.s32.totalorder %s27, %s28
      %p42 = scmp.eq.s32.totalorder %s20, 1
      %p43 = por %p41, %p42
      %p45 = scmp.ne.s32.totalorder %s28, %s44
      %p46 = scmp.eq.s32.totalorder %s20, 0
      %p47 = por %p45, %p46
      %s48 = ssub.s32 %s14, %s21
      %p49 = scmp.eq.s32.totalorder %s48, 0
      %s51 = sadd.s32 %s50, 1
      %s52 = scalar_select %p49, %s50, %s51
      %p55 = pneg %p49
      %p56 = scmp.eq.s32.totalorder %s14, 1
      %p57 = por %p55, %p56
      %p58 = scmp.ne.s32.totalorder %s50, %s53
      %p59 = scmp.eq.s32.totalorder %s14, 0
      %p60 = por %p58, %p59
      %p61 = scmp.ne.s32.totalorder %s50, %s53
      %p62 = scmp.eq.s32.totalorder %s19, 1
      %p63 = por %p61, %p62
      %p64 = scmp.ne.s32.totalorder %s53, %s54
      %p65 = scmp.eq.s32.totalorder %s19, 0
      %p66 = por %p64, %p65
      %p67 = scmp.ne.s32.totalorder %s53, %s54
      %p68 = scmp.eq.s32.totalorder %s20, 1
      %p69 = por %p67, %p68
      %p71 = scmp.ne.s32.totalorder %s54, %s70
      %p72 = scmp.eq.s32.totalorder %s20, 0
      %p73 = por %p71, %p72
      %s74 = ssub.s32 %s14, %s21
      %p75 = scmp.eq.s32.totalorder %s74, 0
      %s77 = sadd.s32 %s76, 1
      %s78 = scalar_select %p75, %s76, %s77
      %p81 = pneg %p75
      %p82 = scmp.eq.s32.totalorder %s14, 1
      %p83 = por %p81, %p82
      %p84 = scmp.ne.s32.totalorder %s76, %s79
      %p85 = scmp.eq.s32.totalorder %s14, 0
      %p86 = por %p84, %p85
      %p87 = scmp.ne.s32.totalorder %s76, %s79
      %p88 = scmp.eq.s32.totalorder %s19, 1
      %p89 = por %p87, %p88
      %p90 = scmp.ne.s32.totalorder %s79, %s80
      %p91 = scmp.eq.s32.totalorder %s19, 0
      %p92 = por %p90, %p91
      %p93 = scmp.ne.s32.totalorder %s79, %s80
      %p94 = scmp.eq.s32.totalorder %s20, 1
      %p95 = por %p93, %p94
      %p97 = scmp.ne.s32.totalorder %s80, %s96
      %p98 = scmp.eq.s32.totalorder %s20, 0
      %p99 = por %p97, %p98
      %p100 = scmp.le.s32.totalorder 1, %s14
      %p101 = scmp.lt.s32.totalorder %s14, 3
      %p102 = pnand %p100, %p101
      %p103 = pneg %p102
      // Predicated region
      $region9: #{tpu_custom_call.1} parent=5 // pred_check
        _
      $region10: #{tpu_custom_call.1} parent=5 // pred_check_branch
        %105 = sbr.rel (%p102) target = $region12
      $region11: #{tpu_custom_call.1} parent=5 // pred_region
        %s106 = ssub.s32 %s14, 1
      $region12: #{tpu_custom_call.1} parent=5 // pred_fallthru
        _
      %p107 = scmp.lt.s32.totalorder %s14, 2
      // Predicated region
      $region13: #{tpu_custom_call.1} parent=5 // pred_check
        %p108 = pneg %p107
      $region14: #{tpu_custom_call.1} parent=5 // pred_check_branch
        %110 = sbr.rel (%p108) target = $region16
      $region15: #{tpu_custom_call.1} parent=5 // pred_region
        // Predicated region
        $region17: #{tpu_custom_call.1} parent=15 // pred_check
          %p111 = pneg %p34
        $region18: #{tpu_custom_call.1} parent=15 // pred_check_branch
          %113 = sbr.rel (%p111) target = $region20
        $region19: #{tpu_custom_call.1} parent=15 // pred_region
          %s114 = sand.u32 %s24, 1
          %s115 = scalar_lea.sflag [#allocation3], %s114
          %s116 = sand.u32 %s24, 1
          %s117 = smul.addr %s116, 8
          %s118 = scalar_lea.vmem [#allocation2], %s117
          %s120 = ssub.s32 128, 128
          %121 = vsyncadd %s115, %s120
          %s122 = smul.addr %s14, 128
          %s123 = scalar_lea.hbm %s0, %s122
          %s125 = sshll.u32 %s118, 4
          %s126 = int_to_ptr.vmem [resolvable:$true] %s125
          %128 = dma.hbm_to_vmem [thread:$0]  %s123, 128, %s126, %s115
        $region20: #{tpu_custom_call.1} parent=15 // pred_fallthru
          _
        // Predicated region
        $region21: #{tpu_custom_call.1} parent=15 // pred_check
          %p129 = pneg %p60
        $region22: #{tpu_custom_call.1} parent=15 // pred_check_branch
          %131 = sbr.rel (%p129) target = $region24
        $region23: #{tpu_custom_call.1} parent=15 // pred_region
          %s132 = sand.u32 %s50, 1
          %s133 = scalar_lea.sflag [#allocation5], %s132
          %s134 = sand.u32 %s50, 1
          %s135 = smul.addr %s134, 8
          %s136 = scalar_lea.vmem [#allocation4], %s135
          %s138 = ssub.s32 128, 128
          %139 = vsyncadd %s133, %s138
          %s140 = smul.addr %s14, 128
          %s141 = scalar_lea.hbm %s1, %s140
          %s143 = sshll.u32 %s136, 4
          %s144 = int_to_ptr.vmem [resolvable:$true] %s143
          %146 = dma.hbm_to_vmem [thread:$0]  %s141, 128, %s144, %s133
        $region24: #{tpu_custom_call.1} parent=15 // pred_fallthru
          _
      $region16: #{tpu_custom_call.1} parent=5 // pred_fallthru
        _
      %p147 = scmp.le.s32.totalorder 1, %s14
      %p148 = scmp.lt.s32.totalorder %s14, 3
      %p149 = pnand %p147, %p148
      %p150 = pneg %p149
      // Predicated region
      $region25: #{tpu_custom_call.1} parent=5 // pred_check
        _
      $region26: #{tpu_custom_call.1} parent=5 // pred_check_branch
        %152 = sbr.rel (%p149) target = $region28
      $region27: #{tpu_custom_call.1} parent=5 // pred_region
        %s153 = ssub.s32 %s14, 1
        %s154 = sand.u32 %s27, 1
        %s155 = scalar_lea.sflag [#allocation3], %s154
        %s156 = sand.u32 %s27, 1
        %s157 = smul.addr %s156, 8
        %s158 = scalar_lea.vmem [#allocation2], %s157
        // Predicated region
        $region29: #{tpu_custom_call.1} parent=27 // pred_check
          %p159 = pneg %p40
        $region30: #{tpu_custom_call.1} parent=27 // pred_check_branch
          %161 = sbr.rel (%p159) target = $region32
        $region31: #{tpu_custom_call.1} parent=27 // pred_region
          %162 = dma.done %s155, 128
        $region32: #{tpu_custom_call.1} parent=27 // pred_fallthru
          _
        %s163 = sand.u32 %s53, 1
        %s164 = scalar_lea.sflag [#allocation5], %s163
        %s165 = sand.u32 %s53, 1
        %s166 = smul.addr %s165, 8
        %s167 = scalar_lea.vmem [#allocation4], %s166
        // Predicated region
        $region33: #{tpu_custom_call.1} parent=27 // pred_check
          %p168 = pneg %p66
        $region34: #{tpu_custom_call.1} parent=27 // pred_check_branch
          %170 = sbr.rel (%p168) target = $region36
        $region35: #{tpu_custom_call.1} parent=27 // pred_region
          %171 = dma.done %s164, 128
        $region36: #{tpu_custom_call.1} parent=27 // pred_fallthru
          _
        %s172 = sand.u32 %s27, 1
        %s173 = scalar_lea.sflag [#allocation3], %s172
        %s174 = sand.u32 %s27, 1
        %s175 = smul.addr %s174, 8
        %s176 = scalar_lea.vmem [#allocation2], %s175
        %p177 = pneg %p40
        %p178 = pneg %p37
        %s179 = sand.u32 %s53, 1
        %s180 = scalar_lea.sflag [#allocation5], %s179
        %s181 = sand.u32 %s53, 1
        %s182 = smul.addr %s181, 8
        %s183 = scalar_lea.vmem [#allocation4], %s182
        %p184 = pneg %p66
        %p185 = pneg %p63
        %p186 = pneg %p92
        %p187 = pneg %p89
        %p188 = scmp.lt.s32.totalorder %s19, 1
        %s189 = scalar_select %p188, %s19, 1
        %s190 = smul.addr %s189, 8
        %s191 = scalar_lea.vmem %s2, %s190
        %p192 = scmp.lt.s32.totalorder %s19, 1
        %s193 = scalar_select %p192, %s19, 1
        %s194 = smul.addr %s193, 8
        %s195 = scalar_lea.vmem %s2, %s194
        %v196 = vld [vmem:[%s158] sm:$0xff]
        %v197 = vld [vmem:[%s167] sm:$0xff]
        %v198 = vxor.u32 %v196, 2147483648
        %v199 = vmul.f32 %v198, 1.442695
        %v200 = vpow.pop %v199
        %v201 = vadd.f32 %v200, 1.0
        %v202 = vrcp.pop %v201
        %v203 = vmul.f32 1.0, %v202
        %v204 = vsub.f32 1.0, %v203
        %v205 = vsub.f32 1.0, %v197
        %v206 = vmul.f32 %v203, %v197
        %v207 = vrot.slane %v206, 4
        %v208 = vadd.f32 %v206, %v207
        %v209 = vrot.slane %v208, 2
        %v210 = vadd.f32 %v208, %v209
        %v211 = vrot.slane %v210, 1
        %v212 = vadd.f32 %v210, %v211
        %v213 = vrot.slane %v203, 4
        %v214 = vadd.f32 %v203, %v213
        %v215 = vrot.slane %v214, 2
        %v216 = vadd.f32 %v214, %v215
        %v217 = vrot.slane %v216, 1
        %v218 = vadd.f32 %v216, %v217
        %v219 = vrot.slane %v197, 4
        %v220 = vadd.f32 %v197, %v219
        %v221 = vrot.slane %v220, 2
        %v222 = vadd.f32 %v220, %v221
        %v223 = vrot.slane %v222, 1
        %v224 = vadd.f32 %v222, %v223
        %v225 = vmul.f32 %v204, %v205
        %v226 = vrot.slane %v225, 4
        %v227 = vadd.f32 %v225, %v226
        %v228 = vrot.slane %v227, 2
        %v229 = vadd.f32 %v227, %v228
        %v230 = vrot.slane %v229, 1
        %v231 = vadd.f32 %v229, %v230
        %v232 = vrot.slane %v204, 4
        %v233 = vadd.f32 %v204, %v232
        %v234 = vrot.slane %v233, 2
        %v235 = vadd.f32 %v233, %v234
        %v236 = vrot.slane %v235, 1
        %v237 = vadd.f32 %v235, %v236
        %v238 = vrot.slane %v205, 4
        %v239 = vadd.f32 %v205, %v238
        %v240 = vrot.slane %v239, 2
        %v241 = vadd.f32 %v239, %v240
        %v242 = vrot.slane %v241, 1
        %v243 = vadd.f32 %v241, %v242
        %244 = vst [vmem:[%s195] sm:$0x1] %v212
        %245 = vst [vmem:[%s195 + $0x1] sm:$0x1] %v218
        %246 = vst [vmem:[%s195 + $0x2] sm:$0x1] %v224
        %247 = vst [vmem:[%s195 + $0x3] sm:$0x1] %v231
        %248 = vst [vmem:[%s195 + $0x4] sm:$0x1] %v237
        %249 = vst [vmem:[%s195 + $0x5] sm:$0x1] %v243
        %p250 = scmp.lt.s32.totalorder %s19, 1
        %s251 = scalar_select %p250, %s19, 1
        %s252 = smul.addr %s251, 8
        %s253 = scalar_lea.vmem %s2, %s252
        // Predicated region
        $region37: #{tpu_custom_call.1} parent=27 // pred_check
          %p254 = pneg %p89
        $region38: #{tpu_custom_call.1} parent=27 // pred_check_branch
          %256 = sbr.rel (%p254) target = $region40
        $region39: #{tpu_custom_call.1} parent=27 // pred_region
          _
        $region40: #{tpu_custom_call.1} parent=27 // pred_fallthru
          _
      $region28: #{tpu_custom_call.1} parent=5 // pred_fallthru
        _
      %p257 = scmp.le.s32.totalorder 2, %s14
      // Predicated region
      $region41: #{tpu_custom_call.1} parent=5 // pred_check
        %p258 = pneg %p257
      $region42: #{tpu_custom_call.1} parent=5 // pred_check_branch
        %260 = sbr.rel (%p258) target = $region44
      $region43: #{tpu_custom_call.1} parent=5 // pred_region
        %s261 = ssub.s32 %s14, 2
        // Predicated region
        $region45: #{tpu_custom_call.1} parent=43 // pred_check
          %p262 = pneg %p95
        $region46: #{tpu_custom_call.1} parent=43 // pred_check_branch
          %264 = sbr.rel (%p262) target = $region48
        $region47: #{tpu_custom_call.1} parent=43 // pred_region
          %p265 = scmp.lt.s32.totalorder %s20, 1
          %s266 = scalar_select %p265, %s20, 1
          %s267 = smul.addr %s266, 8
          %s268 = scalar_lea.vmem %s2, %s267
        $region48: #{tpu_custom_call.1} parent=43 // pred_fallthru
          _
      $region44: #{tpu_custom_call.1} parent=5 // pred_fallthru
        _
    $region6: #{tpu_custom_call.1} parent=1 // loop_footer
      %s18 = sadd.s32 1, %s14
    $region7: #{tpu_custom_call.1} parent=1 // loop_footer_branch
      %13 = sbr.rel target = $region3
    $region8: #{tpu_custom_call.1} parent=1 // loop_exit
      _
    %269 = vsyncpa [#allocation3], 1
    %s270 = scalar_lea.sflag [#allocation3], 1
    %271 = vsyncpa %s270, 1
    %272 = vsyncpa [#allocation5], 1
    %s273 = scalar_lea.sflag [#allocation5], 1
    %274 = vsyncpa %s273, 1

</llo_original>
